<compile_context>
chip_gen: v7x
topology: tpu7x:2x2x1
jax: 0.10.0
libtpu: 0.0.40
codegen_flags: <defaults>
</compile_context>

<pallas_src>
import functools
import math

import jax
import jax.numpy as jnp
from jax.experimental import pallas as pl
from jax.experimental.pallas import tpu as pltpu

_VMEM_WORKING_BUDGET = 36 * 1024 * 1024   # io tiles + f32 working-set target
_VMEM_LIMIT_CAP = 48 * 1024 * 1024        # stay under v7x's 64 MiB physical VMEM


def _round_up(a, m):
    return ((a + m - 1) // m) * m


def _crossnet_kernel(*refs, layer_num, folded):
    if folded:
        x_ref, params_ref, seg_ref, o_ref = refs
        seg = seg_ref[...]                       # (lane, lane) f32 block-diag ones
    else:
        x_ref, params_ref, o_ref = refs
        seg = None

    # Single f32 working copy; the x_0 term re-reads x_ref (io dtype) at its
    # one use per layer instead of keeping a second f32 copy live in VMEM.
    xl = x_ref[...].astype(jnp.float32)          # (TB, lane)

    def layer(i, xl):
        w = params_ref[pl.ds(i, 1), :]                      # (1, lane) f32
        bias = params_ref[pl.ds(i + layer_num, 1), :]       # (1, lane) f32
        t = xl * w
        if seg is None:
            # F % 128 == 0: plain per-row reduce (VPU mul + XLU lane reduce).
            s = jnp.sum(t, axis=1, keepdims=True)           # (TB, 1)
        else:
            # Each 128-lane row packs 128//F batch rows; one MXU pass does the
            # segmented reduce AND the broadcast back across each segment.
            s = jnp.dot(t, seg, preferred_element_type=jnp.float32,
                        precision=jax.lax.Precision.HIGHEST)  # (TB, lane)
        return x_ref[...].astype(jnp.float32) * s + bias + xl

    if layer_num <= 8:
        for i in range(layer_num):               # typical small L: static unroll
            xl = layer(i, xl)
    else:
        # Large L: bounded live range; dynamic per-layer param row reads.
        xl = jax.lax.fori_loop(0, layer_num, layer, xl, unroll=2)

    o_ref[...] = xl.astype(o_ref.dtype)


def _pick_block_rows(n_rows, lane, itemsize):
    """Batch-tile rows: io-dtype sublane-pack aligned, VMEM-budget sized,
    >= 2 grid steps whenever the batch allows (v7x megacore)."""
    pack = max(8, 32 // itemsize)                # f32 -> 8, bf16 -> 16, int8 -> 32
    if n_rows <= pack:
        return n_rows                            # single full-extent block
    # Per row: 2x double-buffered in + out io tiles and ~5 f32 working copies.
    per_row = lane * (4 * itemsize + 5 * 4)
    rows = max(pack, (_VMEM_WORKING_BUDGET // per_row) // pack * pack)
    rows = min(rows, _round_up(-(-n_rows // 2), pack))   # >= 2 grid steps
    rows = min(rows, (n_rows // pack) * pack)            # never exceed the array
    return max(pack, rows)


def _vmem_limit_bytes(block_rows, lane, itemsize, layer_num, folded):
    io_tile = block_rows * lane * itemsize
    f32_tile = block_rows * lane * 4
    params = 2 * layer_num * lane * 4
    seg = lane * lane * 4 if folded else 0
    need = 4 * io_tile + 5 * f32_tile + 2 * (params + seg) + (4 << 20)
    return int(max(16 << 20, min(need, _VMEM_LIMIT_CAP)))


def crossnet_forward(x, kernels, biases):
    """x: (B, F); kernels, biases: (layer_num, F). Returns (B, F) in x.dtype."""
    B, F = x.shape
    layer_num = int(kernels.shape[0])
    itemsize = jnp.dtype(x.dtype).itemsize

    # Lane-dense repack: fold G = 128 // F batch rows into each 128-lane row.
    folded = (F % 128 != 0) and (128 % F == 0) and ((B * F) % 128 == 0)
    G = 128 // F if folded else 1
    lane = F * G
    n_rows = (B * F) // lane
    # TODO(synk): F that neither divides nor is a multiple of 128 falls through
    # to a lane-sparse (masked-store) layout below; repack via strided gather
    # or pad F upstream if that case matters.

    x2 = x.reshape(n_rows, lane) if folded else x     # free reshape (contiguous)

    # One merged parameter slab [kernels; biases] -> a single resident stream.
    kb = jnp.concatenate([kernels, biases], axis=0).astype(jnp.float32)  # (2L, F)
    params = jnp.tile(kb, (1, G)) if folded else kb                      # (2L, lane)

    block_rows = _pick_block_rows(n_rows, lane, itemsize)
    grid = (pl.cdiv(n_rows, block_rows),)    # ragged last tile masked, no host pad

    in_specs = [
        pl.BlockSpec((block_rows, lane), lambda i: (i, 0)),       # x batch tile
        pl.BlockSpec((2 * layer_num, lane), lambda i: (0, 0)),    # params, resident
    ]
    inputs = [x2, params]
    if folded:
        r = jnp.arange(lane) // F
        seg = (r[:, None] == r[None, :]).astype(jnp.float32)      # (128, 128)
        in_specs.append(pl.BlockSpec((lane, lane), lambda i: (0, 0)))
        inputs.append(seg)

    kernel = functools.partial(_crossnet_kernel, layer_num=layer_num, folded=folded)

    seg_bytes = lane * lane * 4 if folded else 0
    cost = pl.CostEstimate(
        flops=6 * B * F * layer_num
        + (2 * n_rows * lane * lane * layer_num if folded else 0),
        transcendentals=0,
        bytes_accessed=2 * B * F * itemsize + 2 * layer_num * F * 4 + seg_bytes,
    )

    out = pl.pallas_call(
        kernel,
        out_shape=jax.ShapeDtypeStruct((n_rows, lane), x.dtype),
        grid_spec=pltpu.PrefetchScalarGridSpec(
            num_scalar_prefetch=0,
            grid=grid,
            in_specs=in_specs,
            out_specs=pl.BlockSpec((block_rows, lane), lambda i: (i, 0)),
        ),
        compiler_params=pltpu.CompilerParams(
            dimension_semantics=("parallel",),     # batch axis -> v7x megacore
            vmem_limit_bytes=_vmem_limit_bytes(
                block_rows, lane, itemsize, layer_num, folded),
        ),
        cost_estimate=cost,
    )(*inputs)

    return out.reshape(B, F) if folded else out


def crossnet_reference(x, kernels, biases):
    """Pure-JAX reference mirroring the PyTorch code."""
    x0 = x[:, :, None]                                  # (B, F, 1)
    xl = x0
    for i in range(kernels.shape[0]):
        w = kernels[i][:, None]                         # (F, 1)
        b = biases[i][:, None]                          # (F, 1)
        xl_w = jnp.tensordot(xl, w, axes=([1], [0]))    # (B, 1, 1)
        dot_ = jnp.matmul(x0, xl_w)                     # (B, F, 1)
        xl = dot_ + b[None] + xl
    return jnp.squeeze(xl, axis=2)


if __name__ == "__main__":
    # Small shapes consistent with the module: in_features=32, layer_num=2.
    B, F, L = 32, 32, 2

    key = jax.random.PRNGKey(0)
    kx, kw = jax.random.split(key)

    x = jax.random.normal(kx, (B, F), dtype=jnp.float32)

    # Parameter init matching the PyTorch __init__ shapes:
    #   kernels[i]: (F, 1) xavier_normal (fan_in=1, fan_out=F -> std=sqrt(2/(F+1)))
    #   bias[i]:    (F, 1) zeros
    xavier_std = math.sqrt(2.0 / (F + 1))
    kernels = jax.random.normal(kw, (L, F), dtype=jnp.float32) * xavier_std
    biases = jnp.zeros((L, F), dtype=jnp.float32)

    out = jax.block_until_ready(crossnet_forward(x, kernels, biases))
    ref = crossnet_reference(x, kernels, biases)

    assert out.shape == (B, F)
    assert jnp.allclose(out, ref, atol=1e-4, rtol=1e-4), "mismatch vs reference"

    print("KERNEL_OK")
</pallas_src>

<mosaic_0001>
module attributes {stable_mosaic.version = 11 : i64} {
  func.func @_crossnet_kernel(%arg0: i32, %arg1: memref<8x128xf32, #tpu.memory_space<vmem>>, %arg2: memref<4x128xf32, #tpu.memory_space<vmem>>, %arg3: memref<128x128xf32, #tpu.memory_space<vmem>>, %arg4: memref<8x128xf32, #tpu.memory_space<vmem>>) attributes {dimension_semantics = [#tpu.dimension_semantics<parallel>], iteration_bounds = array<i64: 1>, scalar_prefetch = 0 : i64, scratch_operands = 0 : i64, tpu.core_type = #tpu.core_type<tc>, window_params = [{transform_indices = @transform_0, window_bounds = array<i64: 8, 128>}, {pipeline_mode = #tpu.pipeline_mode<synchronous>, transform_indices = @transform_1, window_bounds = array<i64: 4, 128>}, {pipeline_mode = #tpu.pipeline_mode<synchronous>, transform_indices = @transform_2, window_bounds = array<i64: 128, 128>}, {transform_indices = @transform_3, window_bounds = array<i64: 8, 128>}]} {
    %c0 = arith.constant 0 : index
    %c0_0 = arith.constant 0 : index
    %0 = vector.load %arg3[%c0, %c0_0] : memref<128x128xf32, #tpu.memory_space<vmem>>, vector<128x128xf32>
    %c0_1 = arith.constant 0 : index
    %c0_2 = arith.constant 0 : index
    %1 = vector.load %arg1[%c0_1, %c0_2] : memref<8x128xf32, #tpu.memory_space<vmem>>, vector<8x128xf32>
    %c0_3 = arith.constant 0 : index
    %c0_4 = arith.constant 0 : index
    %2 = vector.load %arg2[%c0_3, %c0_4] : memref<4x128xf32, #tpu.memory_space<vmem>>, vector<1x128xf32>
    %c2 = arith.constant 2 : index
    %c0_5 = arith.constant 0 : index
    %3 = vector.load %arg2[%c2, %c0_5] : memref<4x128xf32, #tpu.memory_space<vmem>>, vector<1x128xf32>
    %4 = vector.broadcast %2 : vector<1x128xf32> to vector<8x128xf32>
    %5 = arith.mulf %1, %4 : vector<8x128xf32>
    %cst = arith.constant dense<0.000000e+00> : vector<8x128xf32>
    %6 = tpu.matmul %5, %0, %cst {dimension_numbers = #tpu.dot_dimension_numbers<[1], [0], [0], [1], [0, 0, 1, 1], [], []>, precision = #tpu.contract_precision<fp32>} : vector<8x128xf32>, vector<128x128xf32>, vector<8x128xf32> -> vector<8x128xf32>
    %c0_6 = arith.constant 0 : index
    %c0_7 = arith.constant 0 : index
    %7 = vector.load %arg1[%c0_6, %c0_7] : memref<8x128xf32, #tpu.memory_space<vmem>>, vector<8x128xf32>
    %8 = arith.mulf %7, %6 : vector<8x128xf32>
    %9 = vector.broadcast %3 : vector<1x128xf32> to vector<8x128xf32>
    %10 = arith.addf %8, %9 : vector<8x128xf32>
    %11 = arith.addf %10, %1 : vector<8x128xf32>
    %c1 = arith.constant 1 : index
    %c0_8 = arith.constant 0 : index
    %12 = vector.load %arg2[%c1, %c0_8] : memref<4x128xf32, #tpu.memory_space<vmem>>, vector<1x128xf32>
    %c3 = arith.constant 3 : index
    %c0_9 = arith.constant 0 : index
    %13 = vector.load %arg2[%c3, %c0_9] : memref<4x128xf32, #tpu.memory_space<vmem>>, vector<1x128xf32>
    %14 = vector.broadcast %12 : vector<1x128xf32> to vector<8x128xf32>
    %15 = arith.mulf %11, %14 : vector<8x128xf32>
    %cst_10 = arith.constant dense<0.000000e+00> : vector<8x128xf32>
    %16 = tpu.matmul %15, %0, %cst_10 {dimension_numbers = #tpu.dot_dimension_numbers<[1], [0], [0], [1], [0, 0, 1, 1], [], []>, precision = #tpu.contract_precision<fp32>} : vector<8x128xf32>, vector<128x128xf32>, vector<8x128xf32> -> vector<8x128xf32>
    %c0_11 = arith.constant 0 : index
    %c0_12 = arith.constant 0 : index
    %17 = vector.load %arg1[%c0_11, %c0_12] : memref<8x128xf32, #tpu.memory_space<vmem>>, vector<8x128xf32>
    %18 = arith.mulf %17, %16 : vector<8x128xf32>
    %19 = vector.broadcast %13 : vector<1x128xf32> to vector<8x128xf32>
    %20 = arith.addf %18, %19 : vector<8x128xf32>
    %21 = arith.addf %20, %11 : vector<8x128xf32>
    %c0_13 = arith.constant 0 : index
    %c0_14 = arith.constant 0 : index
    %22 = vector.load %arg4[%c0_13, %c0_14] : memref<8x128xf32, #tpu.memory_space<vmem>>, vector<8x128xf32>
    tpu.vector_store %arg4[%c0_13, %c0_14], %21 {strides = array<i32>} : memref<8x128xf32, #tpu.memory_space<vmem>>, vector<8x128xf32>,
    return
  }
  func.func @transform_0(%arg0: i32) -> (i32, i32) {
    %c0_i32 = arith.constant 0 : i32
    %c0_i32_0 = arith.constant 0 : i32
    return %arg0, %c0_i32 : i32, i32
  }
  func.func @transform_1(%arg0: i32) -> (i32, i32) {
    %c0_i32 = arith.constant 0 : i32
    %c0_i32_0 = arith.constant 0 : i32
    %c0_i32_1 = arith.constant 0 : i32
    return %c0_i32, %c0_i32_0 : i32, i32
  }
  func.func @transform_2(%arg0: i32) -> (i32, i32) {
    %c0_i32 = arith.constant 0 : i32
    %c0_i32_0 = arith.constant 0 : i32
    %c0_i32_1 = arith.constant 0 : i32
    return %c0_i32, %c0_i32_0 : i32, i32
  }
  func.func @transform_3(%arg0: i32) -> (i32, i32) {
    %c0_i32 = arith.constant 0 : i32
    %c0_i32_0 = arith.constant 0 : i32
    return %arg0, %c0_i32 : i32, i32
  }
}

</mosaic_0001>

<llo_original>
// kernel: tpu_custom_call.1
$region0: #{tpu_custom_call.1}
  #allocation0 [shape = 'u32[]', space=smem, size = 0x4, offset = 0x4, fixed_abs, tag = 'smem constant byte address 0x4 - core index']
  #allocation1 [shape = 'u32[144,128]{1,0:T(1,128)}', space=vmem, size = 0x12000, scoped, tag = 'internal scratch']
  %s0 = inlined_call_operand.hbm [shape: f32[8,128], index: 0, kind: input, shape index: {}]
  %s1 = inlined_call_operand.hbm [shape: f32[4,128], index: 1, kind: input, shape index: {}]
  %s2 = inlined_call_operand.hbm [shape: f32[128,128], index: 2, kind: input, shape index: {}]
  %s3 = inlined_call_operand.hbm [shape: f32[8,128], index: 3, kind: output, shape index: {}]
  %s4 = sld [smem:[#allocation0]]
  $region34: #{tpu_custom_call.1} parent=0
    _
  %s6 = ssub.s32 1, %s4
  %s7 = scalar_select 0, %s6, %s4
  $region1: #{tpu_custom_call.1} parent=0
    #allocation2 [shape = 'u8[4096]{0}', space=vmem, size = 0x1000, scoped, tag = 'input window, operand 0, single buffered']
    #allocation3 [shape = 's32[1]{0}', space=sflag, size = 0x4, scoped, tag = 'scoped memory for tpu_custom_call.1']
    #allocation4 [shape = 's32[1]{0}', space=sflag, size = 0x4, scoped, tag = 'scoped memory for tpu_custom_call.1']
    #allocation5 [shape = 'u8[2048]{0}', space=vmem, size = 0x800, scoped, tag = 'input window, operand 1, single buffered']
    #allocation6 [shape = 's32[1]{0}', space=sflag, size = 0x4, scoped, tag = 'scoped memory for tpu_custom_call.1']
    #allocation7 [shape = 'u8[65536]{0}', space=vmem, size = 0x10000, scoped, tag = 'input window, operand 2, single buffered']
    #allocation8 [shape = 'u8[4096]{0}', space=vmem, size = 0x1000, scoped, tag = 'output window, operand 0, single buffered']
    %8 = vsyncpa [#allocation3], 0
    %9 = vsyncpa [#allocation6], 0
    %10 = vsyncpa [#allocation4], 0
    // Predicated region
    $region2: #{tpu_custom_call.1} parent=1 // pred_check
      _
    $region3: #{tpu_custom_call.1} parent=1 // pred_check_branch
      %12 = sbr.rel (0) target = $region5
    $region4: #{tpu_custom_call.1} parent=1 // pred_region
      %s14 = ssub.s32 128, 128
      %15 = vsyncadd [#allocation3], %s14
      %s17 = sshll.u32 [#allocation2], 4
      %s18 = int_to_ptr.vmem [resolvable:$true] %s17
      %20 = dma.hbm_to_vmem [thread:$0]  %s0, 128, %s18, [#allocation3]
    $region5: #{tpu_custom_call.1} parent=1 // pred_fallthru
      _
    // Predicated region
    $region6: #{tpu_custom_call.1} parent=1 // pred_check
      _
    $region7: #{tpu_custom_call.1} parent=1 // pred_check_branch
      %22 = sbr.rel (0) target = $region9
    $region8: #{tpu_custom_call.1} parent=1 // pred_region
      %s24 = ssub.s32 64, 64
      %25 = vsyncadd [#allocation6], %s24
      %s27 = sshll.u32 [#allocation5], 4
      %s28 = int_to_ptr.vmem [resolvable:$true] %s27
      %30 = dma.hbm_to_vmem [thread:$0]  %s1, 64, %s28, [#allocation6]
    $region9: #{tpu_custom_call.1} parent=1 // pred_fallthru
      _
    // Predicated region
    $region10: #{tpu_custom_call.1} parent=1 // pred_check
      _
    $region11: #{tpu_custom_call.1} parent=1 // pred_check_branch
      %32 = sbr.rel (0) target = $region13
    $region12: #{tpu_custom_call.1} parent=1 // pred_region
      %s34 = ssub.s32 2048, 2048
      %35 = vsyncadd [#allocation6], %s34
      %s36 = sshll.u32 [#allocation7], 4
      %s37 = int_to_ptr.vmem [resolvable:$true] %s36
      %42 = dma.hbm_to_vmem [thread:$0]  %s2, 2048, %s37, [#allocation6], 128, 128, 8
    $region13: #{tpu_custom_call.1} parent=1 // pred_fallthru
      _
    // Predicated region
    $region14: #{tpu_custom_call.1} parent=1 // pred_check
      _
    $region15: #{tpu_custom_call.1} parent=1 // pred_check_branch
      %44 = sbr.rel (0) target = $region17
    $region16: #{tpu_custom_call.1} parent=1 // pred_region
      %45 = dma.done [#allocation3], 128
    $region17: #{tpu_custom_call.1} parent=1 // pred_fallthru
      _
    // Predicated region
    $region18: #{tpu_custom_call.1} parent=1 // pred_check
      _
    $region19: #{tpu_custom_call.1} parent=1 // pred_check_branch
      %47 = sbr.rel (0) target = $region21
    $region20: #{tpu_custom_call.1} parent=1 // pred_region
      %48 = dma.done [#allocation6], 64
    $region21: #{tpu_custom_call.1} parent=1 // pred_fallthru
      _
    // Predicated region
    $region22: #{tpu_custom_call.1} parent=1 // pred_check
      _
    $region23: #{tpu_custom_call.1} parent=1 // pred_check_branch
      %50 = sbr.rel (0) target = $region25
    $region24: #{tpu_custom_call.1} parent=1 // pred_region
      %51 = dma.done [#allocation6], 2048
    $region25: #{tpu_custom_call.1} parent=1 // pred_fallthru
      _
    %v52 = vld [vmem:[#allocation7] sm:$0xff]
    %v53 = vld [vmem:[#allocation7 + $0x8] sm:$0xff]
    %v54 = vld [vmem:[#allocation7 + $0x10] sm:$0xff]
    %v55 = vld [vmem:[#allocation7 + $0x18] sm:$0xff]
    %v56 = vld [vmem:[#allocation7 + $0x20] sm:$0xff]
    %v57 = vld [vmem:[#allocation7 + $0x28] sm:$0xff]
    %v58 = vld [vmem:[#allocation7 + $0x30] sm:$0xff]
    %v59 = vld [vmem:[#allocation7 + $0x38] sm:$0xff]
    %v60 = vld [vmem:[#allocation7 + $0x40] sm:$0xff]
    %v61 = vld [vmem:[#allocation7 + $0x48] sm:$0xff]
    %v62 = vld [vmem:[#allocation7 + $0x50] sm:$0xff]
    %v63 = vld [vmem:[#allocation7 + $0x58] sm:$0xff]
    %v64 = vld [vmem:[#allocation7 + $0x60] sm:$0xff]
    %v65 = vld [vmem:[#allocation7 + $0x68] sm:$0xff]
    %v66 = vld [vmem:[#allocation7 + $0x70] sm:$0xff]
    %v67 = vld [vmem:[#allocation7 + $0x78] sm:$0xff]
    %v68 = vld [vmem:[#allocation2] sm:$0xff]
    %v69 = vld [vmem:[#allocation5] sm:$0x1]
    %v70 = vld [vmem:[#allocation5 + $0x2] sm:$0x1]
    %v71 = vlaneseq
    %v72 = vshrl.u32 %v71, 7
    %v73 = vsub.s32 0, %v72
    %v74 = vrot.slane %v69, %v73
    %v75 = vmul.f32 %v68, %v74
    %76 = vmatprep.subr.mxu0 0.0
    %v77 = vand.u32 %v52, 4294901760
    %78 = vmatpush1.msra.mxu0 %v77
    %79 = vmatprep.subr.mxu0 0.0
    %v80 = vand.u32 %v53, 4294901760
    %81 = vmatpush1.msra.mxu0 %v80
    %82 = vmatprep.subr.mxu0 0.0
    %v83 = vand.u32 %v54, 4294901760
    %84 = vmatpush1.msra.mxu0 %v83
    %85 = vmatprep.subr.mxu0 0.0
    %v86 = vand.u32 %v55, 4294901760
    %87 = vmatpush1.msra.mxu0 %v86
    %88 = vmatprep.subr.mxu0 0.0
    %v89 = vand.u32 %v56, 4294901760
    %90 = vmatpush1.msra.mxu0 %v89
    %91 = vmatprep.subr.mxu0 0.0
    %v92 = vand.u32 %v57, 4294901760
    %93 = vmatpush1.msra.mxu0 %v92
    %94 = vmatprep.subr.mxu0 0.0
    %v95 = vand.u32 %v58, 4294901760
    %96 = vmatpush1.msra.mxu0 %v95
    %97 = vmatprep.subr.mxu0 0.0
    %v98 = vand.u32 %v59, 4294901760
    %99 = vmatpush1.msra.mxu0 %v98
    %100 = vmatprep.subr.mxu0 0.0
    %v101 = vand.u32 %v60, 4294901760
    %102 = vmatpush1.msra.mxu0 %v101
    %103 = vmatprep.subr.mxu0 0.0
    %v104 = vand.u32 %v61, 4294901760
    %105 = vmatpush1.msra.mxu0 %v104
    %106 = vmatprep.subr.mxu0 0.0
    %v107 = vand.u32 %v62, 4294901760
    %108 = vmatpush1.msra.mxu0 %v107
    %109 = vmatprep.subr.mxu0 0.0
    %v110 = vand.u32 %v63, 4294901760
    %111 = vmatpush1.msra.mxu0 %v110
    %112 = vmatprep.subr.mxu0 0.0
    %v113 = vand.u32 %v64, 4294901760
    %114 = vmatpush1.msra.mxu0 %v113
    %115 = vmatprep.subr.mxu0 0.0
    %v116 = vand.u32 %v65, 4294901760
    %117 = vmatpush1.msra.mxu0 %v116
    %118 = vmatprep.subr.mxu0 0.0
    %v119 = vand.u32 %v66, 4294901760
    %120 = vmatpush1.msra.mxu0 %v119
    %121 = vmatprep.subr.mxu0 0.0
    %v122 = vand.u32 %v67, 4294901760
    %123 = vmatpush1.msra.mxu0 %v122
    %124 = vmatprep.subr.mxu0 0.0
    %125 = vmatpush1.msra.mxu0 0.0
    %126 = vmatprep.subr.mxu0 0.0
    %127 = vmatpush1.msra.mxu0 0.0
    %128 = vmatprep.subr.mxu0 0.0
    %129 = vmatpush1.msra.mxu0 0.0
    %130 = vmatprep.subr.mxu0 0.0
    %131 = vmatpush1.msra.mxu0 0.0
    %132 = vmatprep.subr.mxu0 0.0
    %133 = vmatpush1.msra.mxu0 0.0
    %134 = vmatprep.subr.mxu0 0.0
    %135 = vmatpush1.msra.mxu0 0.0
    %136 = vmatprep.subr.mxu0 0.0
    %137 = vmatpush1.msra.mxu0 0.0
    %138 = vmatprep.subr.mxu0 0.0
    %139 = vmatpush1.msra.mxu0 0.0
    %140 = vmatprep.subr.mxu0 0.0
    %141 = vmatpush1.msra.mxu0 0.0
    %142 = vmatprep.subr.mxu0 0.0
    %143 = vmatpush1.msra.mxu0 0.0
    %144 = vmatprep.subr.mxu0 0.0
    %145 = vmatpush1.msra.mxu0 0.0
    %146 = vmatprep.subr.mxu0 0.0
    %147 = vmatpush1.msra.mxu0 0.0
    %148 = vmatprep.subr.mxu0 0.0
    %149 = vmatpush1.msra.mxu0 0.0
    %150 = vmatprep.subr.mxu0 0.0
    %151 = vmatpush1.msra.mxu0 0.0
    %152 = vmatprep.subr.mxu0 0.0
    %153 = vmatpush1.msra.mxu0 0.0
    %154 = vmatprep.subr.mxu0 0.0
    %155 = vmatpush1.msra.mxu0 0.0
    %156 = vmatprep.mubr.f32.mxu0 0.0
    %v157 = vand.u32 %v75, 4294901760
    %v158 = vsub.f32 %v75, %v157
    %v159 = vand.u32 %v158, 4294901760
    %v160 = vsub.f32 %v158, %v159
    %v161 = vand.u32 %v160, 4294901760
    %162 = vmatmul.mubr.f32.gmra.mrb[0].mxu0 %v161
    %v163 = vpop.f32.mrb[0].mxu0
    %v164 = vadd.f32 0.0, %v163
    %v165 = vpop.f32.mrb[0].mxu0
    %166 = vdwg.mxu0
    %167 = vmatprep.subr.mxu0 0.0
    %v168 = vand.u32 %v52, 4294901760
    %v169 = vsub.f32 %v52, %v168
    %v170 = vand.u32 %v169, 4294901760
    %v171 = vsub.f32 %v169, %v170
    %v172 = vand.u32 %v171, 4294901760
    %173 = vmatpush1.msra.mxu0 %v172
    %174 = vmatprep.subr.mxu0 0.0
    %v175 = vand.u32 %v53, 4294901760
    %v176 = vsub.f32 %v53, %v175
    %v177 = vand.u32 %v176, 4294901760
    %v178 = vsub.f32 %v176, %v177
    %v179 = vand.u32 %v178, 4294901760
    %180 = vmatpush1.msra.mxu0 %v179
    %181 = vmatprep.subr.mxu0 0.0
    %v182 = vand.u32 %v54, 4294901760
    %v183 = vsub.f32 %v54, %v182
    %v184 = vand.u32 %v183, 4294901760
    %v185 = vsub.f32 %v183, %v184
    %v186 = vand.u32 %v185, 4294901760
    %187 = vmatpush1.msra.mxu0 %v186
    %188 = vmatprep.subr.mxu0 0.0
    %v189 = vand.u32 %v55, 4294901760
    %v190 = vsub.f32 %v55, %v189
    %v191 = vand.u32 %v190, 4294901760
    %v192 = vsub.f32 %v190, %v191
    %v193 = vand.u32 %v192, 4294901760
    %194 = vmatpush1.msra.mxu0 %v193
    %195 = vmatprep.subr.mxu0 0.0
    %v196 = vand.u32 %v56, 4294901760
    %v197 = vsub.f32 %v56, %v196
    %v198 = vand.u32 %v197, 4294901760
    %v199 = vsub.f32 %v197, %v198
    %v200 = vand.u32 %v199, 4294901760
    %201 = vmatpush1.msra.mxu0 %v200
    %202 = vmatprep.subr.mxu0 0.0
    %v203 = vand.u32 %v57, 4294901760
    %v204 = vsub.f32 %v57, %v203
    %v205 = vand.u32 %v204, 4294901760
    %v206 = vsub.f32 %v204, %v205
    %v207 = vand.u32 %v206, 4294901760
    %208 = vmatpush1.msra.mxu0 %v207
    %209 = vmatprep.subr.mxu0 0.0
    %v210 = vand.u32 %v58, 4294901760
    %v211 = vsub.f32 %v58, %v210
    %v212 = vand.u32 %v211, 4294901760
    %v213 = vsub.f32 %v211, %v212
    %v214 = vand.u32 %v213, 4294901760
    %215 = vmatpush1.msra.mxu0 %v214
    %216 = vmatprep.subr.mxu0 0.0
    %v217 = vand.u32 %v59, 4294901760
    %v218 = vsub.f32 %v59, %v217
    %v219 = vand.u32 %v218, 4294901760
    %v220 = vsub.f32 %v218, %v219
    %v221 = vand.u32 %v220, 4294901760
    %222 = vmatpush1.msra.mxu0 %v221
    %223 = vmatprep.subr.mxu0 0.0
    %v224 = vand.u32 %v60, 4294901760
    %v225 = vsub.f32 %v60, %v224
    %v226 = vand.u32 %v225, 4294901760
    %v227 = vsub.f32 %v225, %v226
    %v228 = vand.u32 %v227, 4294901760
    %229 = vmatpush1.msra.mxu0 %v228
    %230 = vmatprep.subr.mxu0 0.0
    %v231 = vand.u32 %v61, 4294901760
    %v232 = vsub.f32 %v61, %v231
    %v233 = vand.u32 %v232, 4294901760
    %v234 = vsub.f32 %v232, %v233
    %v235 = vand.u32 %v234, 4294901760
    %236 = vmatpush1.msra.mxu0 %v235
    %237 = vmatprep.subr.mxu0 0.0
    %v238 = vand.u32 %v62, 4294901760
    %v239 = vsub.f32 %v62, %v238
    %v240 = vand.u32 %v239, 4294901760
    %v241 = vsub.f32 %v239, %v240
    %v242 = vand.u32 %v241, 4294901760
    %243 = vmatpush1.msra.mxu0 %v242
    %244 = vmatprep.subr.mxu0 0.0
    %v245 = vand.u32 %v63, 4294901760
    %v246 = vsub.f32 %v63, %v245
    %v247 = vand.u32 %v246, 4294901760
    %v248 = vsub.f32 %v246, %v247
    %v249 = vand.u32 %v248, 4294901760
    %250 = vmatpush1.msra.mxu0 %v249
    %251 = vmatprep.subr.mxu0 0.0
    %v252 = vand.u32 %v64, 4294901760
    %v253 = vsub.f32 %v64, %v252
    %v254 = vand.u32 %v253, 4294901760
    %v255 = vsub.f32 %v253, %v254
    %v256 = vand.u32 %v255, 4294901760
    %257 = vmatpush1.msra.mxu0 %v256
    %258 = vmatprep.subr.mxu0 0.0
    %v259 = vand.u32 %v65, 4294901760
    %v260 = vsub.f32 %v65, %v259
    %v261 = vand.u32 %v260, 4294901760
    %v262 = vsub.f32 %v260, %v261
    %v263 = vand.u32 %v262, 4294901760
    %264 = vmatpush1.msra.mxu0 %v263
    %265 = vmatprep.subr.mxu0 0.0
    %v266 = vand.u32 %v66, 4294901760
    %v267 = vsub.f32 %v66, %v266
    %v268 = vand.u32 %v267, 4294901760
    %v269 = vsub.f32 %v267, %v268
    %v270 = vand.u32 %v269, 4294901760
    %271 = vmatpush1.msra.mxu0 %v270
    %272 = vmatprep.subr.mxu0 0.0
    %v273 = vand.u32 %v67, 4294901760
    %v274 = vsub.f32 %v67, %v273
    %v275 = vand.u32 %v274, 4294901760
    %v276 = vsub.f32 %v274, %v275
    %v277 = vand.u32 %v276, 4294901760
    %278 = vmatpush1.msra.mxu0 %v277
    %279 = vmatprep.subr.mxu0 0.0
    %280 = vmatpush1.msra.mxu0 0.0
    %281 = vmatprep.subr.mxu0 0.0
    %282 = vmatpush1.msra.mxu0 0.0
    %283 = vmatprep.subr.mxu0 0.0
    %284 = vmatpush1.msra.mxu0 0.0
    %285 = vmatprep.subr.mxu0 0.0
    %286 = vmatpush1.msra.mxu0 0.0
    %287 = vmatprep.subr.mxu0 0.0
    %288 = vmatpush1.msra.mxu0 0.0
    %289 = vmatprep.subr.mxu0 0.0
    %290 = vmatpush1.msra.mxu0 0.0
    %291 = vmatprep.subr.mxu0 0.0
    %292 = vmatpush1.msra.mxu0 0.0
    %293 = vmatprep.subr.mxu0 0.0
    %294 = vmatpush1.msra.mxu0 0.0
    %295 = vmatprep.subr.mxu0 0.0
    %296 = vmatpush1.msra.mxu0 0.0
    %297 = vmatprep.subr.mxu0 0.0
    %298 = vmatpush1.msra.mxu0 0.0
    %299 = vmatprep.subr.mxu0 0.0
    %300 = vmatpush1.msra.mxu0 0.0
    %301 = vmatprep.subr.mxu0 0.0
    %302 = vmatpush1.msra.mxu0 0.0
    %303 = vmatprep.subr.mxu0 0.0
    %304 = vmatpush1.msra.mxu0 0.0
    %305 = vmatprep.subr.mxu0 0.0
    %306 = vmatpush1.msra.mxu0 0.0
    %307 = vmatprep.subr.mxu0 0.0
    %308 = vmatpush1.msra.mxu0 0.0
    %309 = vmatprep.subr.mxu0 0.0
    %310 = vmatpush1.msra.mxu0 0.0
    %311 = vmatprep.mubr.f32.mxu0 0.0
    %v312 = vand.u32 %v75, 4294901760
    %313 = vmatmul.mubr.f32.gmra.mrb[0].mxu0 %v312
    %v314 = vpop.f32.mrb[0].mxu0
    %v315 = vadd.f32 %v164, %v314
    %v316 = vpop.f32.mrb[0].mxu0
    %317 = vdwg.mxu0
    %318 = vmatprep.subr.mxu0 0.0
    %v319 = vand.u32 %v52, 4294901760
    %v320 = vsub.f32 %v52, %v319
    %321 = vmatpush1.msra.mxu0 %v320
    %322 = vmatprep.subr.mxu0 0.0
    %v323 = vand.u32 %v53, 4294901760
    %v324 = vsub.f32 %v53, %v323
    %325 = vmatpush1.msra.mxu0 %v324
    %326 = vmatprep.subr.mxu0 0.0
    %v327 = vand.u32 %v54, 4294901760
    %v328 = vsub.f32 %v54, %v327
    %329 = vmatpush1.msra.mxu0 %v328
    %330 = vmatprep.subr.mxu0 0.0
    %v331 = vand.u32 %v55, 4294901760
    %v332 = vsub.f32 %v55, %v331
    %333 = vmatpush1.msra.mxu0 %v332
    %334 = vmatprep.subr.mxu0 0.0
    %v335 = vand.u32 %v56, 4294901760
    %v336 = vsub.f32 %v56, %v335
    %337 = vmatpush1.msra.mxu0 %v336
    %338 = vmatprep.subr.mxu0 0.0
    %v339 = vand.u32 %v57, 4294901760
    %v340 = vsub.f32 %v57, %v339
    %341 = vmatpush1.msra.mxu0 %v340
    %342 = vmatprep.subr.mxu0 0.0
    %v343 = vand.u32 %v58, 4294901760
    %v344 = vsub.f32 %v58, %v343
    %345 = vmatpush1.msra.mxu0 %v344
    %346 = vmatprep.subr.mxu0 0.0
    %v347 = vand.u32 %v59, 4294901760
    %v348 = vsub.f32 %v59, %v347
    %349 = vmatpush1.msra.mxu0 %v348
    %350 = vmatprep.subr.mxu0 0.0
    %v351 = vand.u32 %v60, 4294901760
    %v352 = vsub.f32 %v60, %v351
    %353 = vmatpush1.msra.mxu0 %v352
    %354 = vmatprep.subr.mxu0 0.0
    %v355 = vand.u32 %v61, 4294901760
    %v356 = vsub.f32 %v61, %v355
    %357 = vmatpush1.msra.mxu0 %v356
    %358 = vmatprep.subr.mxu0 0.0
    %v359 = vand.u32 %v62, 4294901760
    %v360 = vsub.f32 %v62, %v359
    %361 = vmatpush1.msra.mxu0 %v360
    %362 = vmatprep.subr.mxu0 0.0
    %v363 = vand.u32 %v63, 4294901760
    %v364 = vsub.f32 %v63, %v363
    %365 = vmatpush1.msra.mxu0 %v364
    %366 = vmatprep.subr.mxu0 0.0
    %v367 = vand.u32 %v64, 4294901760
    %v368 = vsub.f32 %v64, %v367
    %369 = vmatpush1.msra.mxu0 %v368
    %370 = vmatprep.subr.mxu0 0.0
    %v371 = vand.u32 %v65, 4294901760
    %v372 = vsub.f32 %v65, %v371
    %373 = vmatpush1.msra.mxu0 %v372
    %374 = vmatprep.subr.mxu0 0.0
    %v375 = vand.u32 %v66, 4294901760
    %v376 = vsub.f32 %v66, %v375
    %377 = vmatpush1.msra.mxu0 %v376
    %378 = vmatprep.subr.mxu0 0.0
    %v379 = vand.u32 %v67, 4294901760
    %v380 = vsub.f32 %v67, %v379
    %381 = vmatpush1.msra.mxu0 %v380
    %382 = vmatprep.subr.mxu0 0.0
    %383 = vmatpush1.msra.mxu0 0.0
    %384 = vmatprep.subr.mxu0 0.0
    %385 = vmatpush1.msra.mxu0 0.0
    %386 = vmatprep.subr.mxu0 0.0
    %387 = vmatpush1.msra.mxu0 0.0
    %388 = vmatprep.subr.mxu0 0.0
    %389 = vmatpush1.msra.mxu0 0.0
    %390 = vmatprep.subr.mxu0 0.0
    %391 = vmatpush1.msra.mxu0 0.0
    %392 = vmatprep.subr.mxu0 0.0
    %393 = vmatpush1.msra.mxu0 0.0
    %394 = vmatprep.subr.mxu0 0.0
    %395 = vmatpush1.msra.mxu0 0.0
    %396 = vmatprep.subr.mxu0 0.0
    %397 = vmatpush1.msra.mxu0 0.0
    %398 = vmatprep.subr.mxu0 0.0
    %399 = vmatpush1.msra.mxu0 0.0
    %400 = vmatprep.subr.mxu0 0.0
    %401 = vmatpush1.msra.mxu0 0.0
    %402 = vmatprep.subr.mxu0 0.0
    %403 = vmatpush1.msra.mxu0 0.0
    %404 = vmatprep.subr.mxu0 0.0
    %405 = vmatpush1.msra.mxu0 0.0
    %406 = vmatprep.subr.mxu0 0.0
    %407 = vmatpush1.msra.mxu0 0.0
    %408 = vmatprep.subr.mxu0 0.0
    %409 = vmatpush1.msra.mxu0 0.0
    %410 = vmatprep.subr.mxu0 0.0
    %411 = vmatpush1.msra.mxu0 0.0
    %412 = vmatprep.subr.mxu0 0.0
    %413 = vmatpush1.msra.mxu0 0.0
    %414 = vmatprep.mubr.f32.mxu0 0.0
    %v415 = vand.u32 %v75, 4294901760
    %v416 = vsub.f32 %v75, %v415
    %417 = vmatmul.mubr.f32.gmra.mrb[0].mxu0 %v416
    %v418 = vpop.f32.mrb[0].mxu0
    %v419 = vadd.f32 %v315, %v418
    %v420 = vpop.f32.mrb[0].mxu0
    %421 = vdwg.mxu0
    %422 = vmatprep.subr.mxu0 0.0
    %v423 = vand.u32 %v52, 4294901760
    %424 = vmatpush1.msra.mxu0 %v423
    %425 = vmatprep.subr.mxu0 0.0
    %v426 = vand.u32 %v53, 4294901760
    %427 = vmatpush1.msra.mxu0 %v426
    %428 = vmatprep.subr.mxu0 0.0
    %v429 = vand.u32 %v54, 4294901760
    %430 = vmatpush1.msra.mxu0 %v429
    %431 = vmatprep.subr.mxu0 0.0
    %v432 = vand.u32 %v55, 4294901760
    %433 = vmatpush1.msra.mxu0 %v432
    %434 = vmatprep.subr.mxu0 0.0
    %v435 = vand.u32 %v56, 4294901760
    %436 = vmatpush1.msra.mxu0 %v435
    %437 = vmatprep.subr.mxu0 0.0
    %v438 = vand.u32 %v57, 4294901760
    %439 = vmatpush1.msra.mxu0 %v438
    %440 = vmatprep.subr.mxu0 0.0
    %v441 = vand.u32 %v58, 4294901760
    %442 = vmatpush1.msra.mxu0 %v441
    %443 = vmatprep.subr.mxu0 0.0
    %v444 = vand.u32 %v59, 4294901760
    %445 = vmatpush1.msra.mxu0 %v444
    %446 = vmatprep.subr.mxu0 0.0
    %v447 = vand.u32 %v60, 4294901760
    %448 = vmatpush1.msra.mxu0 %v447
    %449 = vmatprep.subr.mxu0 0.0
    %v450 = vand.u32 %v61, 4294901760
    %451 = vmatpush1.msra.mxu0 %v450
    %452 = vmatprep.subr.mxu0 0.0
    %v453 = vand.u32 %v62, 4294901760
    %454 = vmatpush1.msra.mxu0 %v453
    %455 = vmatprep.subr.mxu0 0.0
    %v456 = vand.u32 %v63, 4294901760
    %457 = vmatpush1.msra.mxu0 %v456
    %458 = vmatprep.subr.mxu0 0.0
    %v459 = vand.u32 %v64, 4294901760
    %460 = vmatpush1.msra.mxu0 %v459
    %461 = vmatprep.subr.mxu0 0.0
    %v462 = vand.u32 %v65, 4294901760
    %463 = vmatpush1.msra.mxu0 %v462
    %464 = vmatprep.subr.mxu0 0.0
    %v465 = vand.u32 %v66, 4294901760
    %466 = vmatpush1.msra.mxu0 %v465
    %467 = vmatprep.subr.mxu0 0.0
    %v468 = vand.u32 %v67, 4294901760
    %469 = vmatpush1.msra.mxu0 %v468
    %470 = vmatprep.subr.mxu0 0.0
    %471 = vmatpush1.msra.mxu0 0.0
    %472 = vmatprep.subr.mxu0 0.0
    %473 = vmatpush1.msra.mxu0 0.0
    %474 = vmatprep.subr.mxu0 0.0
    %475 = vmatpush1.msra.mxu0 0.0
    %476 = vmatprep.subr.mxu0 0.0
    %477 = vmatpush1.msra.mxu0 0.0
    %478 = vmatprep.subr.mxu0 0.0
    %479 = vmatpush1.msra.mxu0 0.0
    %480 = vmatprep.subr.mxu0 0.0
    %481 = vmatpush1.msra.mxu0 0.0
    %482 = vmatprep.subr.mxu0 0.0
    %483 = vmatpush1.msra.mxu0 0.0
    %484 = vmatprep.subr.mxu0 0.0
    %485 = vmatpush1.msra.mxu0 0.0
    %486 = vmatprep.subr.mxu0 0.0
    %487 = vmatpush1.msra.mxu0 0.0
    %488 = vmatprep.subr.mxu0 0.0
    %489 = vmatpush1.msra.mxu0 0.0
    %490 = vmatprep.subr.mxu0 0.0
    %491 = vmatpush1.msra.mxu0 0.0
    %492 = vmatprep.subr.mxu0 0.0
    %493 = vmatpush1.msra.mxu0 0.0
    %494 = vmatprep.subr.mxu0 0.0
    %495 = vmatpush1.msra.mxu0 0.0
    %496 = vmatprep.subr.mxu0 0.0
    %497 = vmatpush1.msra.mxu0 0.0
    %498 = vmatprep.subr.mxu0 0.0
    %499 = vmatpush1.msra.mxu0 0.0
    %500 = vmatprep.subr.mxu0 0.0
    %501 = vmatpush1.msra.mxu0 0.0
    %502 = vmatprep.mubr.f32.mxu0 0.0
    %v503 = vand.u32 %v75, 4294901760
    %v504 = vsub.f32 %v75, %v503
    %v505 = vand.u32 %v504, 4294901760
    %506 = vmatmul.mubr.f32.gmra.mrb[0].mxu0 %v505
    %v507 = vpop.f32.mrb[0].mxu0
    %v508 = vadd.f32 %v419, %v507
    %v509 = vpop.f32.mrb[0].mxu0
    %510 = vdwg.mxu0
    %511 = vmatprep.subr.mxu0 0.0
    %v512 = vand.u32 %v52, 4294901760
    %v513 = vsub.f32 %v52, %v512
    %v514 = vand.u32 %v513, 4294901760
    %515 = vmatpush1.msra.mxu0 %v514
    %516 = vmatprep.subr.mxu0 0.0
    %v517 = vand.u32 %v53, 4294901760
    %v518 = vsub.f32 %v53, %v517
    %v519 = vand.u32 %v518, 4294901760
    %520 = vmatpush1.msra.mxu0 %v519
    %521 = vmatprep.subr.mxu0 0.0
    %v522 = vand.u32 %v54, 4294901760
    %v523 = vsub.f32 %v54, %v522
    %v524 = vand.u32 %v523, 4294901760
    %525 = vmatpush1.msra.mxu0 %v524
    %526 = vmatprep.subr.mxu0 0.0
    %v527 = vand.u32 %v55, 4294901760
    %v528 = vsub.f32 %v55, %v527
    %v529 = vand.u32 %v528, 4294901760
    %530 = vmatpush1.msra.mxu0 %v529
    %531 = vmatprep.subr.mxu0 0.0
    %v532 = vand.u32 %v56, 4294901760
    %v533 = vsub.f32 %v56, %v532
    %v534 = vand.u32 %v533, 4294901760
    %535 = vmatpush1.msra.mxu0 %v534
    %536 = vmatprep.subr.mxu0 0.0
    %v537 = vand.u32 %v57, 4294901760
    %v538 = vsub.f32 %v57, %v537
    %v539 = vand.u32 %v538, 4294901760
    %540 = vmatpush1.msra.mxu0 %v539
    %541 = vmatprep.subr.mxu0 0.0
    %v542 = vand.u32 %v58, 4294901760
    %v543 = vsub.f32 %v58, %v542
    %v544 = vand.u32 %v543, 4294901760
    %545 = vmatpush1.msra.mxu0 %v544
    %546 = vmatprep.subr.mxu0 0.0
    %v547 = vand.u32 %v59, 4294901760
    %v548 = vsub.f32 %v59, %v547
    %v549 = vand.u32 %v548, 4294901760
    %550 = vmatpush1.msra.mxu0 %v549
    %551 = vmatprep.subr.mxu0 0.0
    %v552 = vand.u32 %v60, 4294901760
    %v553 = vsub.f32 %v60, %v552
    %v554 = vand.u32 %v553, 4294901760
    %555 = vmatpush1.msra.mxu0 %v554
    %556 = vmatprep.subr.mxu0 0.0
    %v557 = vand.u32 %v61, 4294901760
    %v558 = vsub.f32 %v61, %v557
    %v559 = vand.u32 %v558, 4294901760
    %560 = vmatpush1.msra.mxu0 %v559
    %561 = vmatprep.subr.mxu0 0.0
    %v562 = vand.u32 %v62, 4294901760
    %v563 = vsub.f32 %v62, %v562
    %v564 = vand.u32 %v563, 4294901760
    %565 = vmatpush1.msra.mxu0 %v564
    %566 = vmatprep.subr.mxu0 0.0
    %v567 = vand.u32 %v63, 4294901760
    %v568 = vsub.f32 %v63, %v567
    %v569 = vand.u32 %v568, 4294901760
    %570 = vmatpush1.msra.mxu0 %v569
    %571 = vmatprep.subr.mxu0 0.0
    %v572 = vand.u32 %v64, 4294901760
    %v573 = vsub.f32 %v64, %v572
    %v574 = vand.u32 %v573, 4294901760
    %575 = vmatpush1.msra.mxu0 %v574
    %576 = vmatprep.subr.mxu0 0.0
    %v577 = vand.u32 %v65, 4294901760
    %v578 = vsub.f32 %v65, %v577
    %v579 = vand.u32 %v578, 4294901760
    %580 = vmatpush1.msra.mxu0 %v579
    %581 = vmatprep.subr.mxu0 0.0
    %v582 = vand.u32 %v66, 4294901760
    %v583 = vsub.f32 %v66, %v582
    %v584 = vand.u32 %v583, 4294901760
    %585 = vmatpush1.msra.mxu0 %v584
    %586 = vmatprep.subr.mxu0 0.0
    %v587 = vand.u32 %v67, 4294901760
    %v588 = vsub.f32 %v67, %v587
    %v589 = vand.u32 %v588, 4294901760
    %590 = vmatpush1.msra.mxu0 %v589
    %591 = vmatprep.subr.mxu0 0.0
    %592 = vmatpush1.msra.mxu0 0.0
    %593 = vmatprep.subr.mxu0 0.0
    %594 = vmatpush1.msra.mxu0 0.0
    %595 = vmatprep.subr.mxu0 0.0
    %596 = vmatpush1.msra.mxu0 0.0
    %597 = vmatprep.subr.mxu0 0.0
    %598 = vmatpush1.msra.mxu0 0.0
    %599 = vmatprep.subr.mxu0 0.0
    %600 = vmatpush1.msra.mxu0 0.0
    %601 = vmatprep.subr.mxu0 0.0
    %602 = vmatpush1.msra.mxu0 0.0
    %603 = vmatprep.subr.mxu0 0.0
    %604 = vmatpush1.msra.mxu0 0.0
    %605 = vmatprep.subr.mxu0 0.0
    %606 = vmatpush1.msra.mxu0 0.0
    %607 = vmatprep.subr.mxu0 0.0
    %608 = vmatpush1.msra.mxu0 0.0
    %609 = vmatprep.subr.mxu0 0.0
    %610 = vmatpush1.msra.mxu0 0.0
    %611 = vmatprep.subr.mxu0 0.0
    %612 = vmatpush1.msra.mxu0 0.0
    %613 = vmatprep.subr.mxu0 0.0
    %614 = vmatpush1.msra.mxu0 0.0
    %615 = vmatprep.subr.mxu0 0.0
    %616 = vmatpush1.msra.mxu0 0.0
    %617 = vmatprep.subr.mxu0 0.0
    %618 = vmatpush1.msra.mxu0 0.0
    %619 = vmatprep.subr.mxu0 0.0
    %620 = vmatpush1.msra.mxu0 0.0
    %621 = vmatprep.subr.mxu0 0.0
    %622 = vmatpush1.msra.mxu0 0.0
    %623 = vmatprep.mubr.f32.mxu0 0.0
    %v624 = vand.u32 %v75, 4294901760
    %625 = vmatmul.mubr.f32.gmra.mrb[0].mxu0 %v624
    %v626 = vpop.f32.mrb[0].mxu0
    %v627 = vadd.f32 %v508, %v626
    %v628 = vpop.f32.mrb[0].mxu0
    %629 = vdwg.mxu0
    %630 = vmatprep.subr.mxu0 0.0
    %v631 = vand.u32 %v52, 4294901760
    %632 = vmatpush1.msra.mxu0 %v631
    %633 = vmatprep.subr.mxu0 0.0
    %v634 = vand.u32 %v53, 4294901760
    %635 = vmatpush1.msra.mxu0 %v634
    %636 = vmatprep.subr.mxu0 0.0
    %v637 = vand.u32 %v54, 4294901760
    %638 = vmatpush1.msra.mxu0 %v637
    %639 = vmatprep.subr.mxu0 0.0
    %v640 = vand.u32 %v55, 4294901760
    %641 = vmatpush1.msra.mxu0 %v640
    %642 = vmatprep.subr.mxu0 0.0
    %v643 = vand.u32 %v56, 4294901760
    %644 = vmatpush1.msra.mxu0 %v643
    %645 = vmatprep.subr.mxu0 0.0
    %v646 = vand.u32 %v57, 4294901760
    %647 = vmatpush1.msra.mxu0 %v646
    %648 = vmatprep.subr.mxu0 0.0
    %v649 = vand.u32 %v58, 4294901760
    %650 = vmatpush1.msra.mxu0 %v649
    %651 = vmatprep.subr.mxu0 0.0
    %v652 = vand.u32 %v59, 4294901760
    %653 = vmatpush1.msra.mxu0 %v652
    %654 = vmatprep.subr.mxu0 0.0
    %v655 = vand.u32 %v60, 4294901760
    %656 = vmatpush1.msra.mxu0 %v655
    %657 = vmatprep.subr.mxu0 0.0
    %v658 = vand.u32 %v61, 4294901760
    %659 = vmatpush1.msra.mxu0 %v658
    %660 = vmatprep.subr.mxu0 0.0
    %v661 = vand.u32 %v62, 4294901760
    %662 = vmatpush1.msra.mxu0 %v661
    %663 = vmatprep.subr.mxu0 0.0
    %v664 = vand.u32 %v63, 4294901760
    %665 = vmatpush1.msra.mxu0 %v664
    %666 = vmatprep.subr.mxu0 0.0
    %v667 = vand.u32 %v64, 4294901760
    %668 = vmatpush1.msra.mxu0 %v667
    %669 = vmatprep.subr.mxu0 0.0
    %v670 = vand.u32 %v65, 4294901760
    %671 = vmatpush1.msra.mxu0 %v670
    %672 = vmatprep.subr.mxu0 0.0
    %v673 = vand.u32 %v66, 4294901760
    %674 = vmatpush1.msra.mxu0 %v673
    %675 = vmatprep.subr.mxu0 0.0
    %v676 = vand.u32 %v67, 4294901760
    %677 = vmatpush1.msra.mxu0 %v676
    %678 = vmatprep.subr.mxu0 0.0
    %679 = vmatpush1.msra.mxu0 0.0
    %680 = vmatprep.subr.mxu0 0.0
    %681 = vmatpush1.msra.mxu0 0.0
    %682 = vmatprep.subr.mxu0 0.0
    %683 = vmatpush1.msra.mxu0 0.0
    %684 = vmatprep.subr.mxu0 0.0
    %685 = vmatpush1.msra.mxu0 0.0
    %686 = vmatprep.subr.mxu0 0.0
    %687 = vmatpush1.msra.mxu0 0.0
    %688 = vmatprep.subr.mxu0 0.0
    %689 = vmatpush1.msra.mxu0 0.0
    %690 = vmatprep.subr.mxu0 0.0
    %691 = vmatpush1.msra.mxu0 0.0
    %692 = vmatprep.subr.mxu0 0.0
    %693 = vmatpush1.msra.mxu0 0.0
    %694 = vmatprep.subr.mxu0 0.0
    %695 = vmatpush1.msra.mxu0 0.0
    %696 = vmatprep.subr.mxu0 0.0
    %697 = vmatpush1.msra.mxu0 0.0
    %698 = vmatprep.subr.mxu0 0.0
    %699 = vmatpush1.msra.mxu0 0.0
    %700 = vmatprep.subr.mxu0 0.0
    %701 = vmatpush1.msra.mxu0 0.0
    %702 = vmatprep.subr.mxu0 0.0
    %703 = vmatpush1.msra.mxu0 0.0
    %704 = vmatprep.subr.mxu0 0.0
    %705 = vmatpush1.msra.mxu0 0.0
    %706 = vmatprep.subr.mxu0 0.0
    %707 = vmatpush1.msra.mxu0 0.0
    %708 = vmatprep.subr.mxu0 0.0
    %709 = vmatpush1.msra.mxu0 0.0
    %710 = vmatprep.mubr.f32.mxu0 0.0
    %v711 = vand.u32 %v75, 4294901760
    %712 = vmatmul.mubr.f32.gmra.mrb[0].mxu0 %v711
    %v713 = vpop.f32.mrb[0].mxu0
    %v714 = vadd.f32 %v627, %v713
    %v715 = vpop.f32.mrb[0].mxu0
    %716 = vdwg.mxu0
    %v717 = vmul.f32 %v68, %v714
    %v718 = vlaneseq
    %v719 = vshrl.u32 %v718, 7
    %v720 = vsub.s32 0, %v719
    %v721 = vrot.slane %v70, %v720
    %v722 = vadd.f32 %v717, %v721
    %v723 = vadd.f32 %v722, %v68
    %v724 = vld [vmem:[#allocation5 + $0x1] sm:$0x1]
    %v725 = vld [vmem:[#allocation5 + $0x3] sm:$0x1]
    %v726 = vlaneseq
    %v727 = vshrl.u32 %v726, 7
    %v728 = vsub.s32 0, %v727
    %v729 = vrot.slane %v724, %v728
    %v730 = vmul.f32 %v723, %v729
    %731 = vmatprep.subr.mxu0 0.0
    %v732 = vand.u32 %v52, 4294901760
    %733 = vmatpush1.msra.mxu0 %v732
    %734 = vmatprep.subr.mxu0 0.0
    %v735 = vand.u32 %v53, 4294901760
    %736 = vmatpush1.msra.mxu0 %v735
    %737 = vmatprep.subr.mxu0 0.0
    %v738 = vand.u32 %v54, 4294901760
    %739 = vmatpush1.msra.mxu0 %v738
    %740 = vmatprep.subr.mxu0 0.0
    %v741 = vand.u32 %v55, 4294901760
    %742 = vmatpush1.msra.mxu0 %v741
    %743 = vmatprep.subr.mxu0 0.0
    %v744 = vand.u32 %v56, 4294901760
    %745 = vmatpush1.msra.mxu0 %v744
    %746 = vmatprep.subr.mxu0 0.0
    %v747 = vand.u32 %v57, 4294901760
    %748 = vmatpush1.msra.mxu0 %v747
    %749 = vmatprep.subr.mxu0 0.0
    %v750 = vand.u32 %v58, 4294901760
    %751 = vmatpush1.msra.mxu0 %v750
    %752 = vmatprep.subr.mxu0 0.0
    %v753 = vand.u32 %v59, 4294901760
    %754 = vmatpush1.msra.mxu0 %v753
    %755 = vmatprep.subr.mxu0 0.0
    %v756 = vand.u32 %v60, 4294901760
    %757 = vmatpush1.msra.mxu0 %v756
    %758 = vmatprep.subr.mxu0 0.0
    %v759 = vand.u32 %v61, 4294901760
    %760 = vmatpush1.msra.mxu0 %v759
    %761 = vmatprep.subr.mxu0 0.0
    %v762 = vand.u32 %v62, 4294901760
    %763 = vmatpush1.msra.mxu0 %v762
    %764 = vmatprep.subr.mxu0 0.0
    %v765 = vand.u32 %v63, 4294901760
    %766 = vmatpush1.msra.mxu0 %v765
    %767 = vmatprep.subr.mxu0 0.0
    %v768 = vand.u32 %v64, 4294901760
    %769 = vmatpush1.msra.mxu0 %v768
    %770 = vmatprep.subr.mxu0 0.0
    %v771 = vand.u32 %v65, 4294901760
    %772 = vmatpush1.msra.mxu0 %v771
    %773 = vmatprep.subr.mxu0 0.0
    %v774 = vand.u32 %v66, 4294901760
    %775 = vmatpush1.msra.mxu0 %v774
    %776 = vmatprep.subr.mxu0 0.0
    %v777 = vand.u32 %v67, 4294901760
    %778 = vmatpush1.msra.mxu0 %v777
    %779 = vmatprep.subr.mxu0 0.0
    %780 = vmatpush1.msra.mxu0 0.0
    %781 = vmatprep.subr.mxu0 0.0
    %782 = vmatpush1.msra.mxu0 0.0
    %783 = vmatprep.subr.mxu0 0.0
    %784 = vmatpush1.msra.mxu0 0.0
    %785 = vmatprep.subr.mxu0 0.0
    %786 = vmatpush1.msra.mxu0 0.0
    %787 = vmatprep.subr.mxu0 0.0
    %788 = vmatpush1.msra.mxu0 0.0
    %789 = vmatprep.subr.mxu0 0.0
    %790 = vmatpush1.msra.mxu0 0.0
    %791 = vmatprep.subr.mxu0 0.0
    %792 = vmatpush1.msra.mxu0 0.0
    %793 = vmatprep.subr.mxu0 0.0
    %794 = vmatpush1.msra.mxu0 0.0
    %795 = vmatprep.subr.mxu0 0.0
    %796 = vmatpush1.msra.mxu0 0.0
    %797 = vmatprep.subr.mxu0 0.0
    %798 = vmatpush1.msra.mxu0 0.0
    %799 = vmatprep.subr.mxu0 0.0
    %800 = vmatpush1.msra.mxu0 0.0
    %801 = vmatprep.subr.mxu0 0.0
    %802 = vmatpush1.msra.mxu0 0.0
    %803 = vmatprep.subr.mxu0 0.0
    %804 = vmatpush1.msra.mxu0 0.0
    %805 = vmatprep.subr.mxu0 0.0
    %806 = vmatpush1.msra.mxu0 0.0
    %807 = vmatprep.subr.mxu0 0.0
    %808 = vmatpush1.msra.mxu0 0.0
    %809 = vmatprep.subr.mxu0 0.0
    %810 = vmatpush1.msra.mxu0 0.0
    %811 = vmatprep.mubr.f32.mxu0 0.0
    %v812 = vand.u32 %v730, 4294901760
    %v813 = vsub.f32 %v730, %v812
    %v814 = vand.u32 %v813, 4294901760
    %v815 = vsub.f32 %v813, %v814
    %v816 = vand.u32 %v815, 4294901760
    %817 = vmatmul.mubr.f32.gmra.mrb[0].mxu0 %v816
    %v818 = vpop.f32.mrb[0].mxu0
    %v819 = vadd.f32 0.0, %v818
    %v820 = vpop.f32.mrb[0].mxu0
    %821 = vdwg.mxu0
    %822 = vmatprep.subr.mxu0 0.0
    %v823 = vand.u32 %v52, 4294901760
    %v824 = vsub.f32 %v52, %v823
    %v825 = vand.u32 %v824, 4294901760
    %v826 = vsub.f32 %v824, %v825
    %v827 = vand.u32 %v826, 4294901760
    %828 = vmatpush1.msra.mxu0 %v827
    %829 = vmatprep.subr.mxu0 0.0
    %v830 = vand.u32 %v53, 4294901760
    %v831 = vsub.f32 %v53, %v830
    %v832 = vand.u32 %v831, 4294901760
    %v833 = vsub.f32 %v831, %v832
    %v834 = vand.u32 %v833, 4294901760
    %835 = vmatpush1.msra.mxu0 %v834
    %836 = vmatprep.subr.mxu0 0.0
    %v837 = vand.u32 %v54, 4294901760
    %v838 = vsub.f32 %v54, %v837
    %v839 = vand.u32 %v838, 4294901760
    %v840 = vsub.f32 %v838, %v839
    %v841 = vand.u32 %v840, 4294901760
    %842 = vmatpush1.msra.mxu0 %v841
    %843 = vmatprep.subr.mxu0 0.0
    %v844 = vand.u32 %v55, 4294901760
    %v845 = vsub.f32 %v55, %v844
    %v846 = vand.u32 %v845, 4294901760
    %v847 = vsub.f32 %v845, %v846
    %v848 = vand.u32 %v847, 4294901760
    %849 = vmatpush1.msra.mxu0 %v848
    %850 = vmatprep.subr.mxu0 0.0
    %v851 = vand.u32 %v56, 4294901760
    %v852 = vsub.f32 %v56, %v851
    %v853 = vand.u32 %v852, 4294901760
    %v854 = vsub.f32 %v852, %v853
    %v855 = vand.u32 %v854, 4294901760
    %856 = vmatpush1.msra.mxu0 %v855
    %857 = vmatprep.subr.mxu0 0.0
    %v858 = vand.u32 %v57, 4294901760
    %v859 = vsub.f32 %v57, %v858
    %v860 = vand.u32 %v859, 4294901760
    %v861 = vsub.f32 %v859, %v860
    %v862 = vand.u32 %v861, 4294901760
    %863 = vmatpush1.msra.mxu0 %v862
    %864 = vmatprep.subr.mxu0 0.0
    %v865 = vand.u32 %v58, 4294901760
    %v866 = vsub.f32 %v58, %v865
    %v867 = vand.u32 %v866, 4294901760
    %v868 = vsub.f32 %v866, %v867
    %v869 = vand.u32 %v868, 4294901760
    %870 = vmatpush1.msra.mxu0 %v869
    %871 = vmatprep.subr.mxu0 0.0
    %v872 = vand.u32 %v59, 4294901760
    %v873 = vsub.f32 %v59, %v872
    %v874 = vand.u32 %v873, 4294901760
    %v875 = vsub.f32 %v873, %v874
    %v876 = vand.u32 %v875, 4294901760
    %877 = vmatpush1.msra.mxu0 %v876
    %878 = vmatprep.subr.mxu0 0.0
    %v879 = vand.u32 %v60, 4294901760
    %v880 = vsub.f32 %v60, %v879
    %v881 = vand.u32 %v880, 4294901760
    %v882 = vsub.f32 %v880, %v881
    %v883 = vand.u32 %v882, 4294901760
    %884 = vmatpush1.msra.mxu0 %v883
    %885 = vmatprep.subr.mxu0 0.0
    %v886 = vand.u32 %v61, 4294901760
    %v887 = vsub.f32 %v61, %v886
    %v888 = vand.u32 %v887, 4294901760
    %v889 = vsub.f32 %v887, %v888
    %v890 = vand.u32 %v889, 4294901760
    %891 = vmatpush1.msra.mxu0 %v890
    %892 = vmatprep.subr.mxu0 0.0
    %v893 = vand.u32 %v62, 4294901760
    %v894 = vsub.f32 %v62, %v893
    %v895 = vand.u32 %v894, 4294901760
    %v896 = vsub.f32 %v894, %v895
    %v897 = vand.u32 %v896, 4294901760
    %898 = vmatpush1.msra.mxu0 %v897
    %899 = vmatprep.subr.mxu0 0.0
    %v900 = vand.u32 %v63, 4294901760
    %v901 = vsub.f32 %v63, %v900
    %v902 = vand.u32 %v901, 4294901760
    %v903 = vsub.f32 %v901, %v902
    %v904 = vand.u32 %v903, 4294901760
    %905 = vmatpush1.msra.mxu0 %v904
    %906 = vmatprep.subr.mxu0 0.0
    %v907 = vand.u32 %v64, 4294901760
    %v908 = vsub.f32 %v64, %v907
    %v909 = vand.u32 %v908, 4294901760
    %v910 = vsub.f32 %v908, %v909
    %v911 = vand.u32 %v910, 4294901760
    %912 = vmatpush1.msra.mxu0 %v911
    %913 = vmatprep.subr.mxu0 0.0
    %v914 = vand.u32 %v65, 4294901760
    %v915 = vsub.f32 %v65, %v914
    %v916 = vand.u32 %v915, 4294901760
    %v917 = vsub.f32 %v915, %v916
    %v918 = vand.u32 %v917, 4294901760
    %919 = vmatpush1.msra.mxu0 %v918
    %920 = vmatprep.subr.mxu0 0.0
    %v921 = vand.u32 %v66, 4294901760
    %v922 = vsub.f32 %v66, %v921
    %v923 = vand.u32 %v922, 4294901760
    %v924 = vsub.f32 %v922, %v923
    %v925 = vand.u32 %v924, 4294901760
    %926 = vmatpush1.msra.mxu0 %v925
    %927 = vmatprep.subr.mxu0 0.0
    %v928 = vand.u32 %v67, 4294901760
    %v929 = vsub.f32 %v67, %v928
    %v930 = vand.u32 %v929, 4294901760
    %v931 = vsub.f32 %v929, %v930
    %v932 = vand.u32 %v931, 4294901760
    %933 = vmatpush1.msra.mxu0 %v932
    %934 = vmatprep.subr.mxu0 0.0
    %935 = vmatpush1.msra.mxu0 0.0
    %936 = vmatprep.subr.mxu0 0.0
    %937 = vmatpush1.msra.mxu0 0.0
    %938 = vmatprep.subr.mxu0 0.0
    %939 = vmatpush1.msra.mxu0 0.0
    %940 = vmatprep.subr.mxu0 0.0
    %941 = vmatpush1.msra.mxu0 0.0
    %942 = vmatprep.subr.mxu0 0.0
    %943 = vmatpush1.msra.mxu0 0.0
    %944 = vmatprep.subr.mxu0 0.0
    %945 = vmatpush1.msra.mxu0 0.0
    %946 = vmatprep.subr.mxu0 0.0
    %947 = vmatpush1.msra.mxu0 0.0
    %948 = vmatprep.subr.mxu0 0.0
    %949 = vmatpush1.msra.mxu0 0.0
    %950 = vmatprep.subr.mxu0 0.0
    %951 = vmatpush1.msra.mxu0 0.0
    %952 = vmatprep.subr.mxu0 0.0
    %953 = vmatpush1.msra.mxu0 0.0
    %954 = vmatprep.subr.mxu0 0.0
    %955 = vmatpush1.msra.mxu0 0.0
    %956 = vmatprep.subr.mxu0 0.0
    %957 = vmatpush1.msra.mxu0 0.0
    %958 = vmatprep.subr.mxu0 0.0
    %959 = vmatpush1.msra.mxu0 0.0
    %960 = vmatprep.subr.mxu0 0.0
    %961 = vmatpush1.msra.mxu0 0.0
    %962 = vmatprep.subr.mxu0 0.0
    %963 = vmatpush1.msra.mxu0 0.0
    %964 = vmatprep.subr.mxu0 0.0
    %965 = vmatpush1.msra.mxu0 0.0
    %966 = vmatprep.mubr.f32.mxu0 0.0
    %v967 = vand.u32 %v730, 4294901760
    %968 = vmatmul.mubr.f32.gmra.mrb[0].mxu0 %v967
    %v969 = vpop.f32.mrb[0].mxu0
    %v970 = vadd.f32 %v819, %v969
    %v971 = vpop.f32.mrb[0].mxu0
    %972 = vdwg.mxu0
    %973 = vmatprep.subr.mxu0 0.0
    %v974 = vand.u32 %v52, 4294901760
    %v975 = vsub.f32 %v52, %v974
    %976 = vmatpush1.msra.mxu0 %v975
    %977 = vmatprep.subr.mxu0 0.0
    %v978 = vand.u32 %v53, 4294901760
    %v979 = vsub.f32 %v53, %v978
    %980 = vmatpush1.msra.mxu0 %v979
    %981 = vmatprep.subr.mxu0 0.0
    %v982 = vand.u32 %v54, 4294901760
    %v983 = vsub.f32 %v54, %v982
    %984 = vmatpush1.msra.mxu0 %v983
    %985 = vmatprep.subr.mxu0 0.0
    %v986 = vand.u32 %v55, 4294901760
    %v987 = vsub.f32 %v55, %v986
    %988 = vmatpush1.msra.mxu0 %v987
    %989 = vmatprep.subr.mxu0 0.0
    %v990 = vand.u32 %v56, 4294901760
    %v991 = vsub.f32 %v56, %v990
    %992 = vmatpush1.msra.mxu0 %v991
    %993 = vmatprep.subr.mxu0 0.0
    %v994 = vand.u32 %v57, 4294901760
    %v995 = vsub.f32 %v57, %v994
    %996 = vmatpush1.msra.mxu0 %v995
    %997 = vmatprep.subr.mxu0 0.0
    %v998 = vand.u32 %v58, 4294901760
    %v999 = vsub.f32 %v58, %v998
    %1000 = vmatpush1.msra.mxu0 %v999
    %1001 = vmatprep.subr.mxu0 0.0
    %v1002 = vand.u32 %v59, 4294901760
    %v1003 = vsub.f32 %v59, %v1002
    %1004 = vmatpush1.msra.mxu0 %v1003
    %1005 = vmatprep.subr.mxu0 0.0
    %v1006 = vand.u32 %v60, 4294901760
    %v1007 = vsub.f32 %v60, %v1006
    %1008 = vmatpush1.msra.mxu0 %v1007
    %1009 = vmatprep.subr.mxu0 0.0
    %v1010 = vand.u32 %v61, 4294901760
    %v1011 = vsub.f32 %v61, %v1010
    %1012 = vmatpush1.msra.mxu0 %v1011
    %1013 = vmatprep.subr.mxu0 0.0
    %v1014 = vand.u32 %v62, 4294901760
    %v1015 = vsub.f32 %v62, %v1014
    %1016 = vmatpush1.msra.mxu0 %v1015
    %1017 = vmatprep.subr.mxu0 0.0
    %v1018 = vand.u32 %v63, 4294901760
    %v1019 = vsub.f32 %v63, %v1018
    %1020 = vmatpush1.msra.mxu0 %v1019
    %1021 = vmatprep.subr.mxu0 0.0
    %v1022 = vand.u32 %v64, 4294901760
    %v1023 = vsub.f32 %v64, %v1022
    %1024 = vmatpush1.msra.mxu0 %v1023
    %1025 = vmatprep.subr.mxu0 0.0
    %v1026 = vand.u32 %v65, 4294901760
    %v1027 = vsub.f32 %v65, %v1026
    %1028 = vmatpush1.msra.mxu0 %v1027
    %1029 = vmatprep.subr.mxu0 0.0
    %v1030 = vand.u32 %v66, 4294901760
    %v1031 = vsub.f32 %v66, %v1030
    %1032 = vmatpush1.msra.mxu0 %v1031
    %1033 = vmatprep.subr.mxu0 0.0
    %v1034 = vand.u32 %v67, 4294901760
    %v1035 = vsub.f32 %v67, %v1034
    %1036 = vmatpush1.msra.mxu0 %v1035
    %1037 = vmatprep.subr.mxu0 0.0
    %1038 = vmatpush1.msra.mxu0 0.0
    %1039 = vmatprep.subr.mxu0 0.0
    %1040 = vmatpush1.msra.mxu0 0.0
    %1041 = vmatprep.subr.mxu0 0.0
    %1042 = vmatpush1.msra.mxu0 0.0
    %1043 = vmatprep.subr.mxu0 0.0
    %1044 = vmatpush1.msra.mxu0 0.0
    %1045 = vmatprep.subr.mxu0 0.0
    %1046 = vmatpush1.msra.mxu0 0.0
    %1047 = vmatprep.subr.mxu0 0.0
    %1048 = vmatpush1.msra.mxu0 0.0
    %1049 = vmatprep.subr.mxu0 0.0
    %1050 = vmatpush1.msra.mxu0 0.0
    %1051 = vmatprep.subr.mxu0 0.0
    %1052 = vmatpush1.msra.mxu0 0.0
    %1053 = vmatprep.subr.mxu0 0.0
    %1054 = vmatpush1.msra.mxu0 0.0
    %1055 = vmatprep.subr.mxu0 0.0
    %1056 = vmatpush1.msra.mxu0 0.0
    %1057 = vmatprep.subr.mxu0 0.0
    %1058 = vmatpush1.msra.mxu0 0.0
    %1059 = vmatprep.subr.mxu0 0.0
    %1060 = vmatpush1.msra.mxu0 0.0
    %1061 = vmatprep.subr.mxu0 0.0
    %1062 = vmatpush1.msra.mxu0 0.0
    %1063 = vmatprep.subr.mxu0 0.0
    %1064 = vmatpush1.msra.mxu0 0.0
    %1065 = vmatprep.subr.mxu0 0.0
    %1066 = vmatpush1.msra.mxu0 0.0
    %1067 = vmatprep.subr.mxu0 0.0
    %1068 = vmatpush1.msra.mxu0 0.0
    %1069 = vmatprep.mubr.f32.mxu0 0.0
    %v1070 = vand.u32 %v730, 4294901760
    %v1071 = vsub.f32 %v730, %v1070
    %1072 = vmatmul.mubr.f32.gmra.mrb[0].mxu0 %v1071
    %v1073 = vpop.f32.mrb[0].mxu0
    %v1074 = vadd.f32 %v970, %v1073
    %v1075 = vpop.f32.mrb[0].mxu0
    %1076 = vdwg.mxu0
    %1077 = vmatprep.subr.mxu0 0.0
    %v1078 = vand.u32 %v52, 4294901760
    %1079 = vmatpush1.msra.mxu0 %v1078
    %1080 = vmatprep.subr.mxu0 0.0
    %v1081 = vand.u32 %v53, 4294901760
    %1082 = vmatpush1.msra.mxu0 %v1081
    %1083 = vmatprep.subr.mxu0 0.0
    %v1084 = vand.u32 %v54, 4294901760
    %1085 = vmatpush1.msra.mxu0 %v1084
    %1086 = vmatprep.subr.mxu0 0.0
    %v1087 = vand.u32 %v55, 4294901760
    %1088 = vmatpush1.msra.mxu0 %v1087
    %1089 = vmatprep.subr.mxu0 0.0
    %v1090 = vand.u32 %v56, 4294901760
    %1091 = vmatpush1.msra.mxu0 %v1090
    %1092 = vmatprep.subr.mxu0 0.0
    %v1093 = vand.u32 %v57, 4294901760
    %1094 = vmatpush1.msra.mxu0 %v1093
    %1095 = vmatprep.subr.mxu0 0.0
    %v1096 = vand.u32 %v58, 4294901760
    %1097 = vmatpush1.msra.mxu0 %v1096
    %1098 = vmatprep.subr.mxu0 0.0
    %v1099 = vand.u32 %v59, 4294901760
    %1100 = vmatpush1.msra.mxu0 %v1099
    %1101 = vmatprep.subr.mxu0 0.0
    %v1102 = vand.u32 %v60, 4294901760
    %1103 = vmatpush1.msra.mxu0 %v1102
    %1104 = vmatprep.subr.mxu0 0.0
    %v1105 = vand.u32 %v61, 4294901760
    %1106 = vmatpush1.msra.mxu0 %v1105
    %1107 = vmatprep.subr.mxu0 0.0
    %v1108 = vand.u32 %v62, 4294901760
    %1109 = vmatpush1.msra.mxu0 %v1108
    %1110 = vmatprep.subr.mxu0 0.0
    %v1111 = vand.u32 %v63, 4294901760
    %1112 = vmatpush1.msra.mxu0 %v1111
    %1113 = vmatprep.subr.mxu0 0.0
    %v1114 = vand.u32 %v64, 4294901760
    %1115 = vmatpush1.msra.mxu0 %v1114
    %1116 = vmatprep.subr.mxu0 0.0
    %v1117 = vand.u32 %v65, 4294901760
    %1118 = vmatpush1.msra.mxu0 %v1117
    %1119 = vmatprep.subr.mxu0 0.0
    %v1120 = vand.u32 %v66, 4294901760
    %1121 = vmatpush1.msra.mxu0 %v1120
    %1122 = vmatprep.subr.mxu0 0.0
    %v1123 = vand.u32 %v67, 4294901760
    %1124 = vmatpush1.msra.mxu0 %v1123
    %1125 = vmatprep.subr.mxu0 0.0
    %1126 = vmatpush1.msra.mxu0 0.0
    %1127 = vmatprep.subr.mxu0 0.0
    %1128 = vmatpush1.msra.mxu0 0.0
    %1129 = vmatprep.subr.mxu0 0.0
    %1130 = vmatpush1.msra.mxu0 0.0
    %1131 = vmatprep.subr.mxu0 0.0
    %1132 = vmatpush1.msra.mxu0 0.0
    %1133 = vmatprep.subr.mxu0 0.0
    %1134 = vmatpush1.msra.mxu0 0.0
    %1135 = vmatprep.subr.mxu0 0.0
    %1136 = vmatpush1.msra.mxu0 0.0
    %1137 = vmatprep.subr.mxu0 0.0
    %1138 = vmatpush1.msra.mxu0 0.0
    %1139 = vmatprep.subr.mxu0 0.0
    %1140 = vmatpush1.msra.mxu0 0.0
    %1141 = vmatprep.subr.mxu0 0.0
    %1142 = vmatpush1.msra.mxu0 0.0
    %1143 = vmatprep.subr.mxu0 0.0
    %1144 = vmatpush1.msra.mxu0 0.0
    %1145 = vmatprep.subr.mxu0 0.0
    %1146 = vmatpush1.msra.mxu0 0.0
    %1147 = vmatprep.subr.mxu0 0.0
    %1148 = vmatpush1.msra.mxu0 0.0
    %1149 = vmatprep.subr.mxu0 0.0
    %1150 = vmatpush1.msra.mxu0 0.0
    %1151 = vmatprep.subr.mxu0 0.0
    %1152 = vmatpush1.msra.mxu0 0.0
    %1153 = vmatprep.subr.mxu0 0.0
    %1154 = vmatpush1.msra.mxu0 0.0
    %1155 = vmatprep.subr.mxu0 0.0
    %1156 = vmatpush1.msra.mxu0 0.0
    %1157 = vmatprep.mubr.f32.mxu0 0.0
    %v1158 = vand.u32 %v730, 4294901760
    %v1159 = vsub.f32 %v730, %v1158
    %v1160 = vand.u32 %v1159, 4294901760
    %1161 = vmatmul.mubr.f32.gmra.mrb[0].mxu0 %v1160
    %v1162 = vpop.f32.mrb[0].mxu0
    %v1163 = vadd.f32 %v1074, %v1162
    %v1164 = vpop.f32.mrb[0].mxu0
    %1165 = vdwg.mxu0
    %1166 = vmatprep.subr.mxu0 0.0
    %v1167 = vand.u32 %v52, 4294901760
    %v1168 = vsub.f32 %v52, %v1167
    %v1169 = vand.u32 %v1168, 4294901760
    %1170 = vmatpush1.msra.mxu0 %v1169
    %1171 = vmatprep.subr.mxu0 0.0
    %v1172 = vand.u32 %v53, 4294901760
    %v1173 = vsub.f32 %v53, %v1172
    %v1174 = vand.u32 %v1173, 4294901760
    %1175 = vmatpush1.msra.mxu0 %v1174
    %1176 = vmatprep.subr.mxu0 0.0
    %v1177 = vand.u32 %v54, 4294901760
    %v1178 = vsub.f32 %v54, %v1177
    %v1179 = vand.u32 %v1178, 4294901760
    %1180 = vmatpush1.msra.mxu0 %v1179
    %1181 = vmatprep.subr.mxu0 0.0
    %v1182 = vand.u32 %v55, 4294901760
    %v1183 = vsub.f32 %v55, %v1182
    %v1184 = vand.u32 %v1183, 4294901760
    %1185 = vmatpush1.msra.mxu0 %v1184
    %1186 = vmatprep.subr.mxu0 0.0
    %v1187 = vand.u32 %v56, 4294901760
    %v1188 = vsub.f32 %v56, %v1187
    %v1189 = vand.u32 %v1188, 4294901760
    %1190 = vmatpush1.msra.mxu0 %v1189
    %1191 = vmatprep.subr.mxu0 0.0
    %v1192 = vand.u32 %v57, 4294901760
    %v1193 = vsub.f32 %v57, %v1192
    %v1194 = vand.u32 %v1193, 4294901760
    %1195 = vmatpush1.msra.mxu0 %v1194
    %1196 = vmatprep.subr.mxu0 0.0
    %v1197 = vand.u32 %v58, 4294901760
    %v1198 = vsub.f32 %v58, %v1197
    %v1199 = vand.u32 %v1198, 4294901760
    %1200 = vmatpush1.msra.mxu0 %v1199
    %1201 = vmatprep.subr.mxu0 0.0
    %v1202 = vand.u32 %v59, 4294901760
    %v1203 = vsub.f32 %v59, %v1202
    %v1204 = vand.u32 %v1203, 4294901760
    %1205 = vmatpush1.msra.mxu0 %v1204
    %1206 = vmatprep.subr.mxu0 0.0
    %v1207 = vand.u32 %v60, 4294901760
    %v1208 = vsub.f32 %v60, %v1207
    %v1209 = vand.u32 %v1208, 4294901760
    %1210 = vmatpush1.msra.mxu0 %v1209
    %1211 = vmatprep.subr.mxu0 0.0
    %v1212 = vand.u32 %v61, 4294901760
    %v1213 = vsub.f32 %v61, %v1212
    %v1214 = vand.u32 %v1213, 4294901760
    %1215 = vmatpush1.msra.mxu0 %v1214
    %1216 = vmatprep.subr.mxu0 0.0
    %v1217 = vand.u32 %v62, 4294901760
    %v1218 = vsub.f32 %v62, %v1217
    %v1219 = vand.u32 %v1218, 4294901760
    %1220 = vmatpush1.msra.mxu0 %v1219
    %1221 = vmatprep.subr.mxu0 0.0
    %v1222 = vand.u32 %v63, 4294901760
    %v1223 = vsub.f32 %v63, %v1222
    %v1224 = vand.u32 %v1223, 4294901760
    %1225 = vmatpush1.msra.mxu0 %v1224
    %1226 = vmatprep.subr.mxu0 0.0
    %v1227 = vand.u32 %v64, 4294901760
    %v1228 = vsub.f32 %v64, %v1227
    %v1229 = vand.u32 %v1228, 4294901760
    %1230 = vmatpush1.msra.mxu0 %v1229
    %1231 = vmatprep.subr.mxu0 0.0
    %v1232 = vand.u32 %v65, 4294901760
    %v1233 = vsub.f32 %v65, %v1232
    %v1234 = vand.u32 %v1233, 4294901760
    %1235 = vmatpush1.msra.mxu0 %v1234
    %1236 = vmatprep.subr.mxu0 0.0
    %v1237 = vand.u32 %v66, 4294901760
    %v1238 = vsub.f32 %v66, %v1237
    %v1239 = vand.u32 %v1238, 4294901760
    %1240 = vmatpush1.msra.mxu0 %v1239
    %1241 = vmatprep.subr.mxu0 0.0
    %v1242 = vand.u32 %v67, 4294901760
    %v1243 = vsub.f32 %v67, %v1242
    %v1244 = vand.u32 %v1243, 4294901760
    %1245 = vmatpush1.msra.mxu0 %v1244
    %1246 = vmatprep.subr.mxu0 0.0
    %1247 = vmatpush1.msra.mxu0 0.0
    %1248 = vmatprep.subr.mxu0 0.0
    %1249 = vmatpush1.msra.mxu0 0.0
    %1250 = vmatprep.subr.mxu0 0.0
    %1251 = vmatpush1.msra.mxu0 0.0
    %1252 = vmatprep.subr.mxu0 0.0
    %1253 = vmatpush1.msra.mxu0 0.0
    %1254 = vmatprep.subr.mxu0 0.0
    %1255 = vmatpush1.msra.mxu0 0.0
    %1256 = vmatprep.subr.mxu0 0.0
    %1257 = vmatpush1.msra.mxu0 0.0
    %1258 = vmatprep.subr.mxu0 0.0
    %1259 = vmatpush1.msra.mxu0 0.0
    %1260 = vmatprep.subr.mxu0 0.0
    %1261 = vmatpush1.msra.mxu0 0.0
    %1262 = vmatprep.subr.mxu0 0.0
    %1263 = vmatpush1.msra.mxu0 0.0
    %1264 = vmatprep.subr.mxu0 0.0
    %1265 = vmatpush1.msra.mxu0 0.0
    %1266 = vmatprep.subr.mxu0 0.0
    %1267 = vmatpush1.msra.mxu0 0.0
    %1268 = vmatprep.subr.mxu0 0.0
    %1269 = vmatpush1.msra.mxu0 0.0
    %1270 = vmatprep.subr.mxu0 0.0
    %1271 = vmatpush1.msra.mxu0 0.0
    %1272 = vmatprep.subr.mxu0 0.0
    %1273 = vmatpush1.msra.mxu0 0.0
    %1274 = vmatprep.subr.mxu0 0.0
    %1275 = vmatpush1.msra.mxu0 0.0
    %1276 = vmatprep.subr.mxu0 0.0
    %1277 = vmatpush1.msra.mxu0 0.0
    %1278 = vmatprep.mubr.f32.mxu0 0.0
    %v1279 = vand.u32 %v730, 4294901760
    %1280 = vmatmul.mubr.f32.gmra.mrb[0].mxu0 %v1279
    %v1281 = vpop.f32.mrb[0].mxu0
    %v1282 = vadd.f32 %v1163, %v1281
    %v1283 = vpop.f32.mrb[0].mxu0
    %1284 = vdwg.mxu0
    %1285 = vmatprep.subr.mxu0 0.0
    %v1286 = vand.u32 %v52, 4294901760
    %1287 = vmatpush1.msra.mxu0 %v1286
    %1288 = vmatprep.subr.mxu0 0.0
    %v1289 = vand.u32 %v53, 4294901760
    %1290 = vmatpush1.msra.mxu0 %v1289
    %1291 = vmatprep.subr.mxu0 0.0
    %v1292 = vand.u32 %v54, 4294901760
    %1293 = vmatpush1.msra.mxu0 %v1292
    %1294 = vmatprep.subr.mxu0 0.0
    %v1295 = vand.u32 %v55, 4294901760
    %1296 = vmatpush1.msra.mxu0 %v1295
    %1297 = vmatprep.subr.mxu0 0.0
    %v1298 = vand.u32 %v56, 4294901760
    %1299 = vmatpush1.msra.mxu0 %v1298
    %1300 = vmatprep.subr.mxu0 0.0
    %v1301 = vand.u32 %v57, 4294901760
    %1302 = vmatpush1.msra.mxu0 %v1301
    %1303 = vmatprep.subr.mxu0 0.0
    %v1304 = vand.u32 %v58, 4294901760
    %1305 = vmatpush1.msra.mxu0 %v1304
    %1306 = vmatprep.subr.mxu0 0.0
    %v1307 = vand.u32 %v59, 4294901760
    %1308 = vmatpush1.msra.mxu0 %v1307
    %1309 = vmatprep.subr.mxu0 0.0
    %v1310 = vand.u32 %v60, 4294901760
    %1311 = vmatpush1.msra.mxu0 %v1310
    %1312 = vmatprep.subr.mxu0 0.0
    %v1313 = vand.u32 %v61, 4294901760
    %1314 = vmatpush1.msra.mxu0 %v1313
    %1315 = vmatprep.subr.mxu0 0.0
    %v1316 = vand.u32 %v62, 4294901760
    %1317 = vmatpush1.msra.mxu0 %v1316
    %1318 = vmatprep.subr.mxu0 0.0
    %v1319 = vand.u32 %v63, 4294901760
    %1320 = vmatpush1.msra.mxu0 %v1319
    %1321 = vmatprep.subr.mxu0 0.0
    %v1322 = vand.u32 %v64, 4294901760
    %1323 = vmatpush1.msra.mxu0 %v1322
    %1324 = vmatprep.subr.mxu0 0.0
    %v1325 = vand.u32 %v65, 4294901760
    %1326 = vmatpush1.msra.mxu0 %v1325
    %1327 = vmatprep.subr.mxu0 0.0
    %v1328 = vand.u32 %v66, 4294901760
    %1329 = vmatpush1.msra.mxu0 %v1328
    %1330 = vmatprep.subr.mxu0 0.0
    %v1331 = vand.u32 %v67, 4294901760
    %1332 = vmatpush1.msra.mxu0 %v1331
    %1333 = vmatprep.subr.mxu0 0.0
    %1334 = vmatpush1.msra.mxu0 0.0
    %1335 = vmatprep.subr.mxu0 0.0
    %1336 = vmatpush1.msra.mxu0 0.0
    %1337 = vmatprep.subr.mxu0 0.0
    %1338 = vmatpush1.msra.mxu0 0.0
    %1339 = vmatprep.subr.mxu0 0.0
    %1340 = vmatpush1.msra.mxu0 0.0
    %1341 = vmatprep.subr.mxu0 0.0
    %1342 = vmatpush1.msra.mxu0 0.0
    %1343 = vmatprep.subr.mxu0 0.0
    %1344 = vmatpush1.msra.mxu0 0.0
    %1345 = vmatprep.subr.mxu0 0.0
    %1346 = vmatpush1.msra.mxu0 0.0
    %1347 = vmatprep.subr.mxu0 0.0
    %1348 = vmatpush1.msra.mxu0 0.0
    %1349 = vmatprep.subr.mxu0 0.0
    %1350 = vmatpush1.msra.mxu0 0.0
    %1351 = vmatprep.subr.mxu0 0.0
    %1352 = vmatpush1.msra.mxu0 0.0
    %1353 = vmatprep.subr.mxu0 0.0
    %1354 = vmatpush1.msra.mxu0 0.0
    %1355 = vmatprep.subr.mxu0 0.0
    %1356 = vmatpush1.msra.mxu0 0.0
    %1357 = vmatprep.subr.mxu0 0.0
    %1358 = vmatpush1.msra.mxu0 0.0
    %1359 = vmatprep.subr.mxu0 0.0
    %1360 = vmatpush1.msra.mxu0 0.0
    %1361 = vmatprep.subr.mxu0 0.0
    %1362 = vmatpush1.msra.mxu0 0.0
    %1363 = vmatprep.subr.mxu0 0.0
    %1364 = vmatpush1.msra.mxu0 0.0
    %1365 = vmatprep.mubr.f32.mxu0 0.0
    %v1366 = vand.u32 %v730, 4294901760
    %1367 = vmatmul.mubr.f32.gmra.mrb[0].mxu0 %v1366
    %v1368 = vpop.f32.mrb[0].mxu0
    %v1369 = vadd.f32 %v1282, %v1368
    %v1370 = vpop.f32.mrb[0].mxu0
    %1371 = vdwg.mxu0
    %v1372 = vmul.f32 %v68, %v1369
    %v1373 = vlaneseq
    %v1374 = vshrl.u32 %v1373, 7
    %v1375 = vsub.s32 0, %v1374
    %v1376 = vrot.slane %v725, %v1375
    %v1377 = vadd.f32 %v1372, %v1376
    %v1378 = vadd.f32 %v1377, %v723
    %1379 = vst [vmem:[#allocation8] sm:$0xff] %v1378
    // Predicated region
    $region26: #{tpu_custom_call.1} parent=1 // pred_check
      _
    $region27: #{tpu_custom_call.1} parent=1 // pred_check_branch
      %1381 = sbr.rel (0) target = $region29
    $region28: #{tpu_custom_call.1} parent=1 // pred_region
      %s1383 = ssub.s32 128, 128
      %1384 = vsyncadd [#allocation4], %s1383
      %s1386 = sshll.u32 [#allocation8], 4
      %s1387 = int_to_ptr.vmem [resolvable:$true] %s1386
      %1389 = dma.vmem_to_hbm [thread:$0]  %s1387, 128, %s3, [#allocation4]
    $region29: #{tpu_custom_call.1} parent=1 // pred_fallthru
      _
    // Predicated region
    $region30: #{tpu_custom_call.1} parent=1 // pred_check
      _
    $region31: #{tpu_custom_call.1} parent=1 // pred_check_branch
      %1391 = sbr.rel (0) target = $region33
    $region32: #{tpu_custom_call.1} parent=1 // pred_region
      %1392 = dma.done [#allocation4], 128
    $region33: #{tpu_custom_call.1} parent=1 // pred_fallthru
      _
    %1393 = vsyncpa [#allocation3], 1
    %1394 = vsyncpa [#allocation6], 1
    %1395 = vsyncpa [#allocation4], 1

</llo_original>
